<compile_context>
chip_gen: v6e
topology: v6e:2x2x1
jax: 0.10.0
libtpu: 0.0.40
codegen_flags: <defaults>
</compile_context>

<pallas_src>
import jax
import jax.numpy as jnp
from jax import lax
from jax.experimental import pallas as pl
from jax.experimental.pallas import tpu as pltpu

IGNORE_IDX = 1
IGNORE_IDX_P = 7
GAMMA = 0.2


def _row_multiple(itemsize):
    # Native sublane packing: 8 rows for 4-byte, 16 for 2-byte, 32 for 1-byte dtypes.
    return {4: 8, 2: 16, 1: 32}.get(int(itemsize), 8)


def _vmem_capacity_bytes():
    try:
        info = pltpu.get_tpu_info()
        cap = int(getattr(info, "vmem_capacity_bytes", 0))
        if cap > 0:
            return cap
    except Exception:
        pass
    return 64 * 1024 * 1024  # conservative fallback: v7x per-TensorCore VMEM


def _bytes_per_row(c1, c2, itemsize1, itemsize2):
    """Per-row VMEM footprint: double-buffered input blocks in their HBM dtype + label
    columns + allowance for ~2 full-width f32 elementwise intermediates per head that
    Mosaic may materialize in VMEM (shifted logits / exp)."""
    dbl_buf_inputs = 2 * (itemsize1 * c1 + itemsize2 * c2 + 2 * 4)
    f32_intermediates = 8 * (c1 + c2)
    return dbl_buf_inputs + f32_intermediates


def _choose_tile_rows(n, c1, c2, itemsize1, itemsize2, budget_bytes):
    bpr = _bytes_per_row(c1, c2, itemsize1, itemsize2)
    tn = budget_bytes // max(bpr, 1)
    if tn >= n:
        return n  # single full-array block; no divisibility requirement
    row_mult = _row_multiple(min(itemsize1, itemsize2))
    tn = (tn // row_mult) * row_mult
    return int(max(row_mult, tn))


def _masked_ce_sum(logits, labels, ignore_idx):
    """Sum of softmax cross-entropy losses over rows whose label != ignore_idx.

    logits: (TN, C) float (any), labels: (TN, 1) int32. Padded / garbage rows in a partial
    tile are masked with where() so they can neither contribute nor inject NaN.
    NOTE: labels outside [0, C) other than the ignore index silently give per_row = logsumexp
    (no column matches); torch would assert. Inputs are assumed valid.
    """
    logits = logits.astype(jnp.float32)
    m = jnp.max(logits, axis=-1, keepdims=True)                   # (TN, 1)
    shifted = logits - m                                          # (TN, C), reused twice
    sumexp = jnp.sum(jnp.exp(shifted), axis=-1, keepdims=True)    # (TN, 1), exp rides EUP
    col_ids = lax.broadcasted_iota(jnp.int32, (1, logits.shape[-1]), 1)   # (1, C)
    picked = jnp.sum(jnp.where(col_ids == labels, shifted, 0.0),
                     axis=-1, keepdims=True)                      # (TN, 1)
    per_row = jnp.log(sumexp) - picked                            # lse - logit[label]
    valid = labels != ignore_idx                                  # (TN, 1) bool
    return jnp.sum(jnp.where(valid, per_row, 0.0))


def _two_headed_loss_kernel(pred_ref, labels_ref, pred_p_ref, labels_p_ref, out_ref):
    i = pl.program_id(1)  # reduction ("arbitrary") axis within this split

    @pl.when(i == 0)
    def _init():
        out_ref[...] = jnp.zeros_like(out_ref)

    s1 = _masked_ce_sum(pred_ref[...], labels_ref[...], IGNORE_IDX)
    s2 = _masked_ce_sum(pred_p_ref[...], labels_p_ref[...], IGNORE_IDX_P)

    # Scatter the two scalar partial sums into lanes (0,0) / (0,1) of this split's
    # resident (1, 8, 128) output block and accumulate across the arbitrary axis.
    sub_ids = lax.broadcasted_iota(jnp.int32, out_ref.shape, 1)
    lane_ids = lax.broadcasted_iota(jnp.int32, out_ref.shape, 2)
    contrib = jnp.where((sub_ids == 0) & (lane_ids == 0), s1,
                        jnp.where((sub_ids == 0) & (lane_ids == 1), s2,
                                  jnp.float32(0.0)))
    out_ref[...] = out_ref[...] + contrib


def two_headed_loss(pred, pred_p, labels, labels_p, tile_rows=None):
    """pred: (N, C1) float, pred_p: (N, C2) float, labels/labels_p: (N,) int.

    Logits may be bf16 or f32; the kernel casts to f32 per tile. If tile_rows is given it
    must be a multiple of 8 (or >= N).
    """
    n, c1 = pred.shape
    _, c2 = pred_p.shape
    itemsize1 = jnp.dtype(pred.dtype).itemsize
    itemsize2 = jnp.dtype(pred_p.dtype).itemsize

    cap = _vmem_capacity_bytes()
    budget = int(min(48 * 1024 * 1024, max(8 * 1024 * 1024, cap // 3)))

    if tile_rows is not None:
        tn = int(min(tile_rows, n))
    else:
        tn = _choose_tile_rows(n, c1, c2, itemsize1, itemsize2, budget)

    num_tiles = pl.cdiv(n, tn)
    n_splits = 2 if num_tiles >= 2 else 1      # leading "parallel" axis (v7x: 2 TCs)
    tiles_per_split = pl.cdiv(num_tiles, n_splits)
    n_pad = n_splits * tiles_per_split * tn
    last_blk = num_tiles - 1

    # Pad the (cheap) label columns with the ignore index so rows past N (partial last real
    # tile and any fully-padded tail tiles) are masked out of the loss sums.
    labels2d = jnp.full((n_pad, 1), IGNORE_IDX, dtype=jnp.int32)
    labels2d = labels2d.at[:n, 0].set(labels.astype(jnp.int32))
    labels_p2d = jnp.full((n_pad, 1), IGNORE_IDX_P, dtype=jnp.int32)
    labels_p2d = labels_p2d.at[:n, 0].set(labels_p.astype(jnp.int32))

    def logits_map(c, i):
        # Clamp fully-padded tail tiles back onto the last real block; their labels are all
        # ignore so the logits data actually read is irrelevant.
        return (jnp.minimum(c * tiles_per_split + i, last_blk), 0)

    def labels_map(c, i):
        return (c * tiles_per_split + i, 0)

    tile_need = tn * _bytes_per_row(c1, c2, itemsize1, itemsize2)
    vmem_limit = int(min(int(cap * 0.9),
                         max(16 * 1024 * 1024, tile_need + (4 << 20))))

    partials = pl.pallas_call(
        _two_headed_loss_kernel,
        out_shape=jax.ShapeDtypeStruct((n_splits, 8, 128), jnp.float32),
        grid=(n_splits, tiles_per_split),
        in_specs=[
            pl.BlockSpec((tn, c1), logits_map),
            pl.BlockSpec((tn, 1), labels_map),
            pl.BlockSpec((tn, c2), logits_map),
            pl.BlockSpec((tn, 1), labels_map),
        ],
        # Per-split resident output block (accumulator across the arbitrary axis).
        out_specs=pl.BlockSpec((1, 8, 128), lambda c, i: (c, 0, 0)),
        compiler_params=pltpu.CompilerParams(
            dimension_semantics=("parallel", "arbitrary"),
            vmem_limit_bytes=vmem_limit,
        ),
    )(pred, labels2d, pred_p, labels_p2d)

    # Final reduce / mean / gamma blend in the wrapper (counts come from the unpadded labels).
    sum1 = jnp.sum(partials[:, 0, 0])
    sum2 = jnp.sum(partials[:, 0, 1])
    count1 = jnp.sum((labels != IGNORE_IDX).astype(jnp.float32))
    count2 = jnp.sum((labels_p != IGNORE_IDX_P).astype(jnp.float32))
    return sum1 / count1 + jnp.float32(GAMMA) * (sum2 / count2)


def _reference(pred, pred_p, labels, labels_p):
    """Pure-JAX reference mirroring torch.nn.CrossEntropyLoss(ignore_index=...)."""
    def ce(logits, lab, ignore_idx):
        logits = logits.astype(jnp.float32)
        logp = jax.nn.log_softmax(logits, axis=-1)
        picked = jnp.take_along_axis(logp, lab[:, None].astype(jnp.int32), axis=-1)[:, 0]
        valid = (lab != ignore_idx).astype(jnp.float32)
        return jnp.sum(-picked * valid) / jnp.sum(valid)
    return ce(pred, labels, IGNORE_IDX) + GAMMA * ce(pred_p, labels_p, IGNORE_IDX_P)


if __name__ == "__main__":
    key = jax.random.PRNGKey(0)
    ks = jax.random.split(key, 12)

    # --- Test 1: small single-tile case (matches the module's simple usage) ---
    N, C1, C2 = 8, 32, 16
    pred = jax.random.normal(ks[0], (N, C1), dtype=jnp.float32)
    pred_p = jax.random.normal(ks[1], (N, C2), dtype=jnp.float32)
    labels = jax.random.randint(ks[2], (N,), 0, C1, dtype=jnp.int32).at[2].set(IGNORE_IDX)
    labels_p = jax.random.randint(ks[3], (N,), 0, C2, dtype=jnp.int32).at[5].set(IGNORE_IDX_P)

    loss = two_headed_loss(pred, pred_p, labels, labels_p)
    jax.block_until_ready(loss)
    ref = _reference(pred, pred_p, labels, labels_p)
    assert jnp.allclose(loss, ref, rtol=1e-5, atol=1e-5), (loss, ref)

    # --- Test 2: multi-tile, 2-way split, partial last tile + clamped fully-padded tile ---
    N2 = 20  # cdiv(20, 8) = 3 tiles -> split 1 gets one real+partial and one fully-padded tile
    pred2 = jax.random.normal(ks[4], (N2, C1), dtype=jnp.float32)
    pred2_p = jax.random.normal(ks[5], (N2, C2), dtype=jnp.float32)
    labels2 = jax.random.randint(ks[6], (N2,), 0, C1, dtype=jnp.int32).at[3].set(IGNORE_IDX)
    labels2_p = jax.random.randint(ks[7], (N2,), 0, C2, dtype=jnp.int32).at[11].set(IGNORE_IDX_P)

    loss2 = two_headed_loss(pred2, pred2_p, labels2, labels2_p, tile_rows=8)
    jax.block_until_ready(loss2)
    ref2 = _reference(pred2, pred2_p, labels2, labels2_p)
    assert jnp.allclose(loss2, ref2, rtol=1e-5, atol=1e-5), (loss2, ref2)

    # --- Test 3: bf16 logits in HBM (half the DMA bytes), f32 math inside the kernel ---
    pred_bf = pred.astype(jnp.bfloat16)
    pred_p_bf = pred_p.astype(jnp.bfloat16)
    loss3 = two_headed_loss(pred_bf, pred_p_bf, labels, labels_p)
    jax.block_until_ready(loss3)
    ref3 = _reference(pred_bf.astype(jnp.float32), pred_p_bf.astype(jnp.float32),
                      labels, labels_p)
    assert jnp.allclose(loss3, ref3, rtol=1e-4, atol=1e-4), (loss3, ref3)

    # --- Test 4: even multi-tile grid across both splits (no partial tiles) ---
    N4, C1b, C2b = 64, 128, 32
    pred4 = jax.random.normal(ks[8], (N4, C1b), dtype=jnp.float32)
    pred4_p = jax.random.normal(ks[9], (N4, C2b), dtype=jnp.float32)
    labels4 = jax.random.randint(ks[10], (N4,), 0, C1b, dtype=jnp.int32).at[7].set(IGNORE_IDX)
    labels4_p = jax.random.randint(ks[11], (N4,), 0, C2b, dtype=jnp.int32).at[13].set(IGNORE_IDX_P)

    loss4 = two_headed_loss(pred4, pred4_p, labels4, labels4_p, tile_rows=16)
    jax.block_until_ready(loss4)
    ref4 = _reference(pred4, pred4_p, labels4, labels4_p)
    assert jnp.allclose(loss4, ref4, rtol=1e-5, atol=1e-5), (loss4, ref4)

    print("KERNEL_OK")
</pallas_src>

<mosaic_0001>
module attributes {stable_mosaic.version = 11 : i64} {
  func.func @_two_headed_loss_kernel(%arg0: i32, %arg1: i32, %arg2: memref<8x32xf32, #tpu.memory_space<vmem>>, %arg3: memref<8x1xi32, #tpu.memory_space<vmem>>, %arg4: memref<8x16xf32, #tpu.memory_space<vmem>>, %arg5: memref<8x1xi32, #tpu.memory_space<vmem>>, %arg6: memref<1x8x128xf32, #tpu.memory_space<vmem>>) attributes {dimension_semantics = [#tpu.dimension_semantics<parallel>, #tpu.dimension_semantics<arbitrary>], iteration_bounds = array<i64: 1, 1>, scalar_prefetch = 0 : i64, scratch_operands = 0 : i64, tpu.core_type = #tpu.core_type<tc>, window_params = [{transform_indices = @transform_0, window_bounds = array<i64: 8, 32>}, {transform_indices = @transform_1, window_bounds = array<i64: 8, 1>}, {transform_indices = @transform_2, window_bounds = array<i64: 8, 16>}, {transform_indices = @transform_3, window_bounds = array<i64: 8, 1>}, {transform_indices = @transform_4, window_bounds = array<i64: 1, 8, 128>}]} {
    %c0_i32 = arith.constant 0 : i32
    %0 = arith.cmpi eq, %arg1, %c0_i32 : i32
    %1 = arith.extui %0 : i1 to i32
    %c0_i32_0 = arith.constant 0 : i32
    %2 = arith.cmpi ne, %1, %c0_i32_0 : i32
    scf.if %2 {
      %cst_30 = arith.constant 0.000000e+00 : f32
      %77 = vector.broadcast %cst_30 : f32 to vector<1x8x128xf32>
      %c0_31 = arith.constant 0 : index
      %c0_32 = arith.constant 0 : index
      %c0_33 = arith.constant 0 : index
      %78 = vector.load %arg6[%c0_31, %c0_32, %c0_33] : memref<1x8x128xf32, #tpu.memory_space<vmem>>, vector<1x8x128xf32>
      tpu.vector_store %arg6[%c0_31, %c0_32, %c0_33], %77 {strides = array<i32>} : memref<1x8x128xf32, #tpu.memory_space<vmem>>, vector<1x8x128xf32>,
    } else {
    }
    %c0 = arith.constant 0 : index
    %c0_1 = arith.constant 0 : index
    %3 = vector.load %arg2[%c0, %c0_1] : memref<8x32xf32, #tpu.memory_space<vmem>>, vector<8x32xf32>
    %c0_2 = arith.constant 0 : index
    %c0_3 = arith.constant 0 : index
    %4 = vector.load %arg3[%c0_2, %c0_3] : memref<8x1xi32, #tpu.memory_space<vmem>>, vector<8x1xi32>
    %cst = arith.constant dense<0xFF800000> : vector<8xf32>
    %5 = vector.multi_reduction <maximumf>, %3, %cst [1] : vector<8x32xf32> to vector<8xf32>
    %6 = vector.shape_cast %5 : vector<8xf32> to vector<8x1xf32>
    %7 = vector.broadcast %6 : vector<8x1xf32> to vector<8x32xf32>
    %8 = arith.subf %3, %7 : vector<8x32xf32>
    %9 = math.exp %8 : vector<8x32xf32>
    %cst_4 = arith.constant dense<0.000000e+00> : vector<8xf32>
    %10 = vector.multi_reduction <add>, %9, %cst_4 [1] : vector<8x32xf32> to vector<8xf32>
    %11 = vector.shape_cast %10 : vector<8xf32> to vector<8x1xf32>
    %12 = tpu.iota {dimensions = array<i32: 1>} : vector<1x32xi32>
    %13 = vector.broadcast %12 : vector<1x32xi32> to vector<8x32xi32>
    %14 = vector.broadcast %4 : vector<8x1xi32> to vector<8x32xi32>
    %15 = arith.cmpi eq, %13, %14 : vector<8x32xi32>
    %cst_5 = arith.constant 0.000000e+00 : f32
    %16 = vector.broadcast %cst_5 : f32 to vector<8x32xf32>
    %17 = arith.select %15, %8, %16 : vector<8x32xi1>, vector<8x32xf32>
    %cst_6 = arith.constant dense<0.000000e+00> : vector<8xf32>
    %18 = vector.multi_reduction <add>, %17, %cst_6 [1] : vector<8x32xf32> to vector<8xf32>
    %19 = vector.shape_cast %18 : vector<8xf32> to vector<8x1xf32>
    %20 = math.log %11 : vector<8x1xf32>
    %21 = arith.subf %20, %19 : vector<8x1xf32>
    %c1_i32 = arith.constant 1 : i32
    %22 = vector.broadcast %c1_i32 : i32 to vector<8x1xi32>
    %23 = arith.cmpi ne, %4, %22 : vector<8x1xi32>
    %cst_7 = arith.constant 0.000000e+00 : f32
    %24 = vector.broadcast %cst_7 : f32 to vector<8x1xf32>
    %25 = arith.select %23, %21, %24 : vector<8x1xi1>, vector<8x1xf32>
    %26 = vector.shape_cast %25 : vector<8x1xf32> to vector<1x8x1xf32>
    %cst_8 = arith.constant dense<0.000000e+00> : vector<1xf32>
    %27 = vector.multi_reduction <add>, %26, %cst_8 [1, 2] : vector<1x8x1xf32> to vector<1xf32>
    %28 = vector.shape_cast %27 : vector<1xf32> to vector<1x1x1xf32>
    %29 = vector.extract %28[0, 0, 0] : f32 from vector<1x1x1xf32>
    %c0_9 = arith.constant 0 : index
    %c0_10 = arith.constant 0 : index
    %30 = vector.load %arg4[%c0_9, %c0_10] : memref<8x16xf32, #tpu.memory_space<vmem>>, vector<8x16xf32>
    %c0_11 = arith.constant 0 : index
    %c0_12 = arith.constant 0 : index
    %31 = vector.load %arg5[%c0_11, %c0_12] : memref<8x1xi32, #tpu.memory_space<vmem>>, vector<8x1xi32>
    %cst_13 = arith.constant dense<0xFF800000> : vector<8xf32>
    %32 = vector.multi_reduction <maximumf>, %30, %cst_13 [1] : vector<8x16xf32> to vector<8xf32>
    %33 = vector.shape_cast %32 : vector<8xf32> to vector<8x1xf32>
    %34 = vector.broadcast %33 : vector<8x1xf32> to vector<8x16xf32>
    %35 = arith.subf %30, %34 : vector<8x16xf32>
    %36 = math.exp %35 : vector<8x16xf32>
    %cst_14 = arith.constant dense<0.000000e+00> : vector<8xf32>
    %37 = vector.multi_reduction <add>, %36, %cst_14 [1] : vector<8x16xf32> to vector<8xf32>
    %38 = vector.shape_cast %37 : vector<8xf32> to vector<8x1xf32>
    %39 = tpu.iota {dimensions = array<i32: 1>} : vector<1x16xi32>
    %40 = vector.broadcast %39 : vector<1x16xi32> to vector<8x16xi32>
    %41 = vector.broadcast %31 : vector<8x1xi32> to vector<8x16xi32>
    %42 = arith.cmpi eq, %40, %41 : vector<8x16xi32>
    %cst_15 = arith.constant 0.000000e+00 : f32
    %43 = vector.broadcast %cst_15 : f32 to vector<8x16xf32>
    %44 = arith.select %42, %35, %43 : vector<8x16xi1>, vector<8x16xf32>
    %cst_16 = arith.constant dense<0.000000e+00> : vector<8xf32>
    %45 = vector.multi_reduction <add>, %44, %cst_16 [1] : vector<8x16xf32> to vector<8xf32>
    %46 = vector.shape_cast %45 : vector<8xf32> to vector<8x1xf32>
    %47 = math.log %38 : vector<8x1xf32>
    %48 = arith.subf %47, %46 : vector<8x1xf32>
    %c7_i32 = arith.constant 7 : i32
    %49 = vector.broadcast %c7_i32 : i32 to vector<8x1xi32>
    %50 = arith.cmpi ne, %31, %49 : vector<8x1xi32>
    %cst_17 = arith.constant 0.000000e+00 : f32
    %51 = vector.broadcast %cst_17 : f32 to vector<8x1xf32>
    %52 = arith.select %50, %48, %51 : vector<8x1xi1>, vector<8x1xf32>
    %53 = vector.shape_cast %52 : vector<8x1xf32> to vector<1x8x1xf32>
    %cst_18 = arith.constant dense<0.000000e+00> : vector<1xf32>
    %54 = vector.multi_reduction <add>, %53, %cst_18 [1, 2] : vector<1x8x1xf32> to vector<1xf32>
    %55 = vector.shape_cast %54 : vector<1xf32> to vector<1x1x1xf32>
    %56 = vector.extract %55[0, 0, 0] : f32 from vector<1x1x1xf32>
    %57 = tpu.iota {dimensions = array<i32: 1>} : vector<1x8x128xi32>
    %58 = tpu.iota {dimensions = array<i32: 2>} : vector<1x8x128xi32>
    %c0_i32_19 = arith.constant 0 : i32
    %59 = vector.broadcast %c0_i32_19 : i32 to vector<1x8x128xi32>
    %60 = arith.cmpi eq, %57, %59 : vector<1x8x128xi32>
    %c0_i32_20 = arith.constant 0 : i32
    %61 = vector.broadcast %c0_i32_20 : i32 to vector<1x8x128xi32>
    %62 = arith.cmpi eq, %58, %61 : vector<1x8x128xi32>
    %63 = arith.andi %60, %62 : vector<1x8x128xi1>
    %c0_i32_21 = arith.constant 0 : i32
    %64 = vector.broadcast %c0_i32_21 : i32 to vector<1x8x128xi32>
    %65 = arith.cmpi eq, %57, %64 : vector<1x8x128xi32>
    %c1_i32_22 = arith.constant 1 : i32
    %66 = vector.broadcast %c1_i32_22 : i32 to vector<1x8x128xi32>
    %67 = arith.cmpi eq, %58, %66 : vector<1x8x128xi32>
    %68 = arith.andi %65, %67 : vector<1x8x128xi1>
    %cst_23 = arith.constant 0.000000e+00 : f32
    %69 = vector.broadcast %56 : f32 to vector<1x8x128xf32>
    %70 = vector.broadcast %cst_23 : f32 to vector<1x8x128xf32>
    %71 = arith.select %68, %69, %70 : vector<1x8x128xi1>, vector<1x8x128xf32>
    %72 = vector.broadcast %29 : f32 to vector<1x8x128xf32>
    %73 = arith.select %63, %72, %71 : vector<1x8x128xi1>, vector<1x8x128xf32>
    %c0_24 = arith.constant 0 : index
    %c0_25 = arith.constant 0 : index
    %c0_26 = arith.constant 0 : index
    %74 = vector.load %arg6[%c0_24, %c0_25, %c0_26] : memref<1x8x128xf32, #tpu.memory_space<vmem>>, vector<1x8x128xf32>
    %75 = arith.addf %74, %73 : vector<1x8x128xf32>
    %c0_27 = arith.constant 0 : index
    %c0_28 = arith.constant 0 : index
    %c0_29 = arith.constant 0 : index
    %76 = vector.load %arg6[%c0_27, %c0_28, %c0_29] : memref<1x8x128xf32, #tpu.memory_space<vmem>>, vector<1x8x128xf32>
    tpu.vector_store %arg6[%c0_27, %c0_28, %c0_29], %75 {strides = array<i32>} : memref<1x8x128xf32, #tpu.memory_space<vmem>>, vector<1x8x128xf32>,
    return
  }
  func.func @transform_0(%arg0: i32, %arg1: i32) -> (i32, i32) {
    %c1_i32 = arith.constant 1 : i32
    %0 = arith.muli %arg0, %c1_i32 : i32
    %1 = arith.addi %0, %arg1 : i32
    %c0_i32 = arith.constant 0 : i32
    %2 = arith.minsi %1, %c0_i32 : i32
    %c0_i32_0 = arith.constant 0 : i32
    %c0_i32_1 = arith.constant 0 : i32
    return %2, %c0_i32_0 : i32, i32
  }
  func.func @transform_1(%arg0: i32, %arg1: i32) -> (i32, i32) {
    %c1_i32 = arith.constant 1 : i32
    %0 = arith.muli %arg0, %c1_i32 : i32
    %1 = arith.addi %0, %arg1 : i32
    %c0_i32 = arith.constant 0 : i32
    %c0_i32_0 = arith.constant 0 : i32
    return %1, %c0_i32 : i32, i32
  }
  func.func @transform_2(%arg0: i32, %arg1: i32) -> (i32, i32) {
    %c1_i32 = arith.constant 1 : i32
    %0 = arith.muli %arg0, %c1_i32 : i32
    %1 = arith.addi %0, %arg1 : i32
    %c0_i32 = arith.constant 0 : i32
    %2 = arith.minsi %1, %c0_i32 : i32
    %c0_i32_0 = arith.constant 0 : i32
    %c0_i32_1 = arith.constant 0 : i32
    return %2, %c0_i32_0 : i32, i32
  }
  func.func @transform_3(%arg0: i32, %arg1: i32) -> (i32, i32) {
    %c1_i32 = arith.constant 1 : i32
    %0 = arith.muli %arg0, %c1_i32 : i32
    %1 = arith.addi %0, %arg1 : i32
    %c0_i32 = arith.constant 0 : i32
    %c0_i32_0 = arith.constant 0 : i32
    return %1, %c0_i32 : i32, i32
  }
  func.func @transform_4(%arg0: i32, %arg1: i32) -> (i32, i32, i32) {
    %c0_i32 = arith.constant 0 : i32
    %c0_i32_0 = arith.constant 0 : i32
    %c0_i32_1 = arith.constant 0 : i32
    return %arg0, %c0_i32, %c0_i32_0 : i32, i32, i32
  }
}

</mosaic_0001>

<llo_original>
// kernel: tpu_custom_call.1
$region0: #{tpu_custom_call.1}
  #allocation0 [shape = 'u32[]', space=smem, size = 0x4, offset = 0x4, fixed_abs, tag = 'smem constant byte address 0x4 - core index']
  #allocation1 [shape = 'u32[144,128]{1,0:T(1,128)}', space=vmem, size = 0x12000, scoped, tag = 'internal scratch']
  %s0 = inlined_call_operand.vmem [shape: f32[8,32], index: 0, kind: input, shape index: {}]
  %s1 = inlined_call_operand.vmem [shape: s32[8,1], index: 1, kind: input, shape index: {}]
  %s2 = inlined_call_operand.vmem [shape: f32[8,16], index: 2, kind: input, shape index: {}]
  %s3 = inlined_call_operand.vmem [shape: s32[8,1], index: 3, kind: input, shape index: {}]
  %s4 = inlined_call_operand.hbm [shape: f32[1,8,128], index: 4, kind: output, shape index: {}]
  %s5 = sld [smem:[#allocation0]]
  $region30: #{tpu_custom_call.1} parent=0
    _
  %s7 = ssub.s32 1, %s5
  %s8 = scalar_select 0, %s7, %s5
  $region1: #{tpu_custom_call.1} parent=0
    #allocation2 [shape = 'u8[4096]{0}', space=vmem, size = 0x1000, scoped, tag = 'output window, operand 0, single buffered']
    #allocation3 [shape = 's32[1]{0}', space=sflag, size = 0x4, scoped, tag = 'scoped memory for tpu_custom_call.1']
    %9 = vsyncpa [#allocation3], 0
    // Predicated region
    $region2: #{tpu_custom_call.1} parent=1 // pred_check
      _
    $region3: #{tpu_custom_call.1} parent=1 // pred_check_branch
      %11 = sbr.rel (0) target = $region5
    $region4: #{tpu_custom_call.1} parent=1 // pred_region
      %s12 = sadd.s32 0, 0
      %p13 = scmp.lt.s32.totalorder %s12, 0
      %s14 = scalar_select %p13, %s12, 0
      %p15 = scmp.lt.s32.totalorder %s14, 0
      %s16 = scalar_select %p15, %s14, 0
      %s17 = smul.addr %s16, 8
      %s18 = scalar_lea.vmem %s0, %s17
      %s19 = sadd.s32 0, 0
      %p20 = scmp.lt.s32.totalorder %s19, 0
      %s21 = scalar_select %p20, %s19, 0
    $region5: #{tpu_custom_call.1} parent=1 // pred_fallthru
      _
    // Predicated region
    $region6: #{tpu_custom_call.1} parent=1 // pred_check
      _
    $region7: #{tpu_custom_call.1} parent=1 // pred_check_branch
      %23 = sbr.rel (0) target = $region9
    $region8: #{tpu_custom_call.1} parent=1 // pred_region
      %s24 = sadd.s32 0, 0
      %p25 = scmp.lt.s32.totalorder %s24, 0
      %s26 = scalar_select %p25, %s24, 0
      %s27 = smul.addr %s26, 8
      %s28 = scalar_lea.vmem %s1, %s27
      %s29 = sadd.s32 0, 0
    $region9: #{tpu_custom_call.1} parent=1 // pred_fallthru
      _
    // Predicated region
    $region10: #{tpu_custom_call.1} parent=1 // pred_check
      _
    $region11: #{tpu_custom_call.1} parent=1 // pred_check_branch
      %31 = sbr.rel (0) target = $region13
    $region12: #{tpu_custom_call.1} parent=1 // pred_region
      %s32 = sadd.s32 0, 0
      %p33 = scmp.lt.s32.totalorder %s32, 0
      %s34 = scalar_select %p33, %s32, 0
      %p35 = scmp.lt.s32.totalorder %s34, 0
      %s36 = scalar_select %p35, %s34, 0
      %s37 = smul.addr %s36, 8
      %s38 = scalar_lea.vmem %s2, %s37
      %s39 = sadd.s32 0, 0
      %p40 = scmp.lt.s32.totalorder %s39, 0
      %s41 = scalar_select %p40, %s39, 0
    $region13: #{tpu_custom_call.1} parent=1 // pred_fallthru
      _
    // Predicated region
    $region14: #{tpu_custom_call.1} parent=1 // pred_check
      _
    $region15: #{tpu_custom_call.1} parent=1 // pred_check_branch
      %43 = sbr.rel (0) target = $region17
    $region16: #{tpu_custom_call.1} parent=1 // pred_region
      %s44 = sadd.s32 0, 0
      %p45 = scmp.lt.s32.totalorder %s44, 0
      %s46 = scalar_select %p45, %s44, 0
      %s47 = smul.addr %s46, 8
      %s48 = scalar_lea.vmem %s3, %s47
      %s49 = sadd.s32 0, 0
    $region17: #{tpu_custom_call.1} parent=1 // pred_fallthru
      _
    %s50 = sadd.s32 0, 0
    %p51 = scmp.lt.s32.totalorder %s50, 0
    %s52 = scalar_select %p51, %s50, 0
    %p53 = scmp.lt.s32.totalorder %s52, 0
    %s54 = scalar_select %p53, %s52, 0
    %s55 = smul.addr %s54, 8
    %s56 = scalar_lea.vmem %s0, %s55
    %s57 = sadd.s32 0, 0
    %p58 = scmp.lt.s32.totalorder %s57, 0
    %s59 = scalar_select %p58, %s57, 0
    %s60 = smul.addr %s59, 8
    %s61 = scalar_lea.vmem %s1, %s60
    %s62 = sadd.s32 0, 0
    %p63 = scmp.lt.s32.totalorder %s62, 0
    %s64 = scalar_select %p63, %s62, 0
    %p65 = scmp.lt.s32.totalorder %s64, 0
    %s66 = scalar_select %p65, %s64, 0
    %s67 = smul.addr %s66, 8
    %s68 = scalar_lea.vmem %s2, %s67
    %s69 = sadd.s32 0, 0
    %p70 = scmp.lt.s32.totalorder %s69, 0
    %s71 = scalar_select %p70, %s69, 0
    %s72 = smul.addr %s71, 8
    %s73 = scalar_lea.vmem %s3, %s72
    %s74 = sadd.s32 0, 0
    %p75 = scmp.lt.s32.totalorder %s74, 0
    %s76 = scalar_select %p75, %s74, 0
    %p77 = scmp.lt.s32.totalorder %s76, 0
    %s78 = scalar_select %p77, %s76, 0
    %s79 = smul.addr %s78, 8
    %s80 = scalar_lea.vmem %s0, %s79
    %s81 = sadd.s32 0, 0
    %p82 = scmp.lt.s32.totalorder %s81, 0
    %s83 = scalar_select %p82, %s81, 0
    %s84 = sadd.s32 0, 0
    %p85 = scmp.lt.s32.totalorder %s84, 0
    %s86 = scalar_select %p85, %s84, 0
    %s87 = smul.addr %s86, 8
    %s88 = scalar_lea.vmem %s1, %s87
    %s89 = sadd.s32 0, 0
    %s90 = sadd.s32 0, 0
    %p91 = scmp.lt.s32.totalorder %s90, 0
    %s92 = scalar_select %p91, %s90, 0
    %p93 = scmp.lt.s32.totalorder %s92, 0
    %s94 = scalar_select %p93, %s92, 0
    %s95 = smul.addr %s94, 8
    %s96 = scalar_lea.vmem %s2, %s95
    %s97 = sadd.s32 0, 0
    %p98 = scmp.lt.s32.totalorder %s97, 0
    %s99 = scalar_select %p98, %s97, 0
    %s100 = sadd.s32 0, 0
    %p101 = scmp.lt.s32.totalorder %s100, 0
    %s102 = scalar_select %p101, %s100, 0
    %s103 = smul.addr %s102, 8
    %s104 = scalar_lea.vmem %s3, %s103
    %s105 = sadd.s32 0, 0
    %p106 = scmp.eq.s32.totalorder 0, 0
    // Predicated region
    $region18: #{tpu_custom_call.1} parent=1 // pred_check
      %p107 = pneg %p106
    $region19: #{tpu_custom_call.1} parent=1 // pred_check_branch
      %109 = sbr.rel (%p107) target = $region21
    $region20: #{tpu_custom_call.1} parent=1 // pred_region
      %110 = vst [vmem:[#allocation2] sm:$0xff] 0.0
    $region21: #{tpu_custom_call.1} parent=1 // pred_fallthru
      _
    %v111 = vld [vmem:[%s80] sm:$0xff]
    %v112 = vld [vmem:[%s88] sm:$0xff]
    %vm113 = vcmask 261120
    %v114 = vsel %vm113, %v111, -inf
    %115 = vmax.xlane.f32.xlu0 %v114
    %v116 = vpop.xlane.xlu0 %115
    %v117 = vsub.f32 %v111, %v116
    %v118 = vmul.f32 %v117, 1.442695
    %v119 = vpow.pop %v118
    %v120 = vsel %vm113, %v119, 0.0
    %121 = vadd.xlane.f32.xlu0 %v120
    %v122 = vpop.xlane.xlu0 %121
    %v123 = vlaneseq
    %v124 = vand.u32 %v123, 127
    %125 = vset.pattern.permute.xlu0 0
    %126 = vperm.xlu0 %125, %v112
    %v127 = vpop.permute.xlu0 %126
    %vm128 = vcmp.eq.s32.totalorder %v124, %v127
    %v129 = vsel %vm128, %v117, 0.0
    %v130 = vsel %vm113, %v129, 0.0
    %131 = vadd.xlane.f32.xlu0 %v130
    %v132 = vpop.xlane.xlu0 %131
    %v133 = vlog2.pop %v122
    %v134 = vmul.f32 %v133, 0.6931472
    %v135 = vsub.f32 %v134, %v132
    %vm136 = vcmp.ne.s32.totalorder %v112, 1
    %v137 = vsel %vm136, %v135, 0.0
    %vm138 = vcmask 7168
    %v139 = vsel %vm138, %v137, 0.0
    %140 = vadd.xlane.f32.xlu0 %v139
    %v141 = vpop.xlane.xlu0 %140
    %v142 = vrot.slane %v141, 4
    %v143 = vadd.f32 %v141, %v142
    %v144 = vrot.slane %v143, 2
    %v145 = vadd.f32 %v143, %v144
    %v146 = vrot.slane %v145, 1
    %v147 = vadd.f32 %v145, %v146
    %s148 = vtos %v147
    %v149 = vld [vmem:[%s96] sm:$0xff]
    %v150 = vld [vmem:[%s104] sm:$0xff]
    %vm151 = vcmask 130048
    %v152 = vsel %vm151, %v149, -inf
    %153 = vmax.xlane.f32.xlu0 %v152
    %v154 = vpop.xlane.xlu0 %153
    %v155 = vsub.f32 %v149, %v154
    %v156 = vmul.f32 %v155, 1.442695
    %v157 = vpow.pop %v156
    %v158 = vsel %vm151, %v157, 0.0
    %159 = vadd.xlane.f32.xlu0 %v158
    %v160 = vpop.xlane.xlu0 %159
    %161 = vset.pattern.permute.xlu0 0
    %162 = vperm.xlu0 %161, %v150
    %v163 = vpop.permute.xlu0 %162
    %vm164 = vcmp.eq.s32.totalorder %v124, %v163
    %v165 = vsel %vm164, %v155, 0.0
    %v166 = vsel %vm151, %v165, 0.0
    %167 = vadd.xlane.f32.xlu0 %v166
    %v168 = vpop.xlane.xlu0 %167
    %v169 = vlog2.pop %v160
    %v170 = vmul.f32 %v169, 0.6931472
    %v171 = vsub.f32 %v170, %v168
    %vm172 = vcmp.ne.s32.totalorder %v150, 7
    %v173 = vsel %vm172, %v171, 0.0
    %v174 = vsel %vm138, %v173, 0.0
    %175 = vadd.xlane.f32.xlu0 %v174
    %v176 = vpop.xlane.xlu0 %175
    %v177 = vrot.slane %v176, 4
    %v178 = vadd.f32 %v176, %v177
    %v179 = vrot.slane %v178, 2
    %v180 = vadd.f32 %v178, %v179
    %v181 = vrot.slane %v180, 1
    %v182 = vadd.f32 %v180, %v181
    %s183 = vtos %v182
    %v184 = vlaneseq
    %v185 = vshrl.u32 %v184, 7
    %vm186 = vcmp.eq.s32.totalorder %v185, 0
    %vm187 = vcmp.eq.s32.totalorder %v124, 0
    %vm188 = vmand %vm186, %vm187
    %vm189 = vcmp.eq.s32.totalorder %v124, 1
    %vm190 = vmand %vm186, %vm189
    %v191 = vstv %s183
    %v192 = vsel %vm190, %v191, 0.0
    %v193 = vstv %s148
    %v194 = vsel %vm188, %v193, %v192
    %v195 = vld [vmem:[#allocation2] sm:$0xff]
    %v196 = vadd.f32 %v195, %v194
    %197 = vst [vmem:[#allocation2] sm:$0xff] %v196
    // Predicated region
    $region22: #{tpu_custom_call.1} parent=1 // pred_check
      _
    $region23: #{tpu_custom_call.1} parent=1 // pred_check_branch
      %199 = sbr.rel (0) target = $region25
    $region24: #{tpu_custom_call.1} parent=1 // pred_region
      %s201 = ssub.s32 128, 128
      %202 = vsyncadd [#allocation3], %s201
      %s204 = sshll.u32 [#allocation2], 4
      %s205 = int_to_ptr.vmem [resolvable:$true] %s204
      %207 = dma.vmem_to_hbm [thread:$0]  %s205, 128, %s4, [#allocation3]
    $region25: #{tpu_custom_call.1} parent=1 // pred_fallthru
      _
    // Predicated region
    $region26: #{tpu_custom_call.1} parent=1 // pred_check
      _
    $region27: #{tpu_custom_call.1} parent=1 // pred_check_branch
      %209 = sbr.rel (0) target = $region29
    $region28: #{tpu_custom_call.1} parent=1 // pred_region
      %210 = dma.done [#allocation3], 128
    $region29: #{tpu_custom_call.1} parent=1 // pred_fallthru
      _
    %211 = vsyncpa [#allocation3], 1

</llo_original>
